<compile_context>
chip_gen: v5e
topology: v5e:2x2
jax: 0.10.0
libtpu: 0.0.40
codegen_flags: <defaults>
</compile_context>

<pallas_src>
import functools

import jax
import jax.numpy as jnp
from jax.experimental import pallas as pl
from jax.experimental.pallas import tpu as pltpu


def _round_up(n: int, m: int) -> int:
    return ((n + m - 1) // m) * m


def linear_kernel(x_ref, w_ref, b_ref, o_ref):
    # x_ref: (TM, F), w_ref: (F, C), b_ref: (1, C), o_ref: (TM, C)
    acc = jnp.dot(x_ref[...], w_ref[...], preferred_element_type=jnp.float32)
    o_ref[...] = (acc + b_ref[...].astype(jnp.float32)).astype(o_ref.dtype)


@functools.partial(jax.jit, static_argnames=("tm",))
def public_classifier_forward(x, w, b, *, tm=512):
    """Pallas TPU implementation of PublicClassifier.forward (nn.Linear)."""
    B, F = x.shape
    F2, C = w.shape
    assert F == F2
    out_dtype = x.dtype
    b2d = b.reshape(1, C)

    itemsize = jnp.dtype(x.dtype).itemsize
    cost = pl.CostEstimate(
        flops=2 * B * F * C,
        transcendentals=0,
        bytes_accessed=itemsize * (B * F + F * C + C + B * C),
    )

    # TODO(synk): if F*C ever grows past VMEM, add a K/N grid with an f32
    # accumulator scratch + pl.when init/finalize, re-derive tile sizes against
    # v7x's 64 MiB VMEM, and single-buffer the constant weight block
    # (pipeline_mode=pl.Buffered(1)).
    # TODO(synk): optionally cast x/w to bfloat16 (keep f32 accumulate + bias
    # add) to halve HBM read traffic if model accuracy permits.

    if B <= 128:
        # Grid-less single invocation for the shipped small shapes: full-array
        # blocks are exempt from the (8, 128) divisibility rule, so no padding
        # or reslicing is needed and there is zero pipeline-step overhead.
        return pl.pallas_call(
            linear_kernel,
            out_shape=jax.ShapeDtypeStruct((B, C), out_dtype),
            cost_estimate=cost,
        )(x, w, b2d)

    # Tiled path over batch. Cap the tile so the grid has >= 2 steps (v7x has
    # two TensorCores) while keeping the tile sublane-aligned (multiple of 8).
    tm_eff = min(tm, _round_up((B + 1) // 2, 8))
    grid = pl.cdiv(B, tm_eff)

    return pl.pallas_call(
        linear_kernel,
        out_shape=jax.ShapeDtypeStruct((B, C), out_dtype),
        grid_spec=pltpu.PrefetchScalarGridSpec(
            num_scalar_prefetch=0,
            grid=(grid,),
            in_specs=[
                pl.BlockSpec((tm_eff, F), lambda i: (i, 0)),  # x tile over batch
                pl.BlockSpec((F, C), lambda i: (0, 0)),       # full weight (tiny)
                pl.BlockSpec((1, C), lambda i: (0, 0)),       # bias row
            ],
            out_specs=pl.BlockSpec((tm_eff, C), lambda i: (i, 0)),
        ),
        compiler_params=pltpu.CompilerParams(
            dimension_semantics=("parallel",),
        ),
        cost_estimate=cost,
    )(x, w, b2d)


if __name__ == "__main__":
    key = jax.random.PRNGKey(0)
    kx, kw, kb, kx2, kx3 = jax.random.split(key, 5)

    # Small shapes implied by the module: batch of feature vectors.
    batch = 16
    input_features = 32
    num_classes = 16

    x = jax.random.normal(kx, (batch, input_features), dtype=jnp.float32)
    # Deterministic parameter init (synthetic, matching nn.Linear's scale).
    bound = 1.0 / (input_features ** 0.5)
    w = jax.random.uniform(kw, (input_features, num_classes),
                           minval=-bound, maxval=bound, dtype=jnp.float32)
    b = jax.random.uniform(kb, (num_classes,),
                           minval=-bound, maxval=bound, dtype=jnp.float32)

    # Small-shape path (single grid-less invocation, no padding).
    out = jax.block_until_ready(public_classifier_forward(x, w, b))
    ref = x @ w + b
    assert out.shape == (batch, num_classes)
    assert jnp.allclose(out, ref, atol=1e-5, rtol=1e-5)

    # Tiled path with a ragged last tile (grid >= 2, no HBM padding of x).
    big_batch = 300
    x2 = jax.random.normal(kx2, (big_batch, input_features), dtype=jnp.float32)
    out2 = jax.block_until_ready(public_classifier_forward(x2, w, b))
    ref2 = x2 @ w + b
    assert out2.shape == (big_batch, num_classes)
    assert jnp.allclose(out2, ref2, atol=1e-5, rtol=1e-5)

    # Larger batch exercising the full tm=512 tile plus a ragged tail.
    big_batch2 = 1100
    x3 = jax.random.normal(kx3, (big_batch2, input_features), dtype=jnp.float32)
    out3 = jax.block_until_ready(public_classifier_forward(x3, w, b))
    ref3 = x3 @ w + b
    assert out3.shape == (big_batch2, num_classes)
    assert jnp.allclose(out3, ref3, atol=1e-5, rtol=1e-5)

    print("KERNEL_OK")
</pallas_src>

<mosaic_0001>
module attributes {stable_mosaic.version = 11 : i64} {
  func.func @linear_kernel(%arg0: memref<16x32xf32, #tpu.memory_space<vmem>>, %arg1: memref<32x16xf32, #tpu.memory_space<vmem>>, %arg2: memref<1x16xf32, #tpu.memory_space<vmem>>, %arg3: memref<16x16xf32, #tpu.memory_space<vmem>>) attributes {dimension_semantics = [], scalar_prefetch = 0 : i64, scratch_operands = 0 : i64, tpu.core_type = #tpu.core_type<tc>} {
    %c0 = arith.constant 0 : index
    %c0_0 = arith.constant 0 : index
    %0 = vector.load %arg0[%c0, %c0_0] : memref<16x32xf32, #tpu.memory_space<vmem>>, vector<16x32xf32>
    %c0_1 = arith.constant 0 : index
    %c0_2 = arith.constant 0 : index
    %1 = vector.load %arg1[%c0_1, %c0_2] : memref<32x16xf32, #tpu.memory_space<vmem>>, vector<32x16xf32>
    %cst = arith.constant dense<0.000000e+00> : vector<16x16xf32>
    %2 = tpu.matmul %0, %1, %cst {dimension_numbers = #tpu.dot_dimension_numbers<[1], [0], [0], [1], [0, 0, 1, 1], [], []>} : vector<16x32xf32>, vector<32x16xf32>, vector<16x16xf32> -> vector<16x16xf32>
    %c0_3 = arith.constant 0 : index
    %c0_4 = arith.constant 0 : index
    %3 = vector.load %arg2[%c0_3, %c0_4] : memref<1x16xf32, #tpu.memory_space<vmem>>, vector<1x16xf32>
    %4 = vector.broadcast %3 : vector<1x16xf32> to vector<16x16xf32>
    %5 = arith.addf %2, %4 : vector<16x16xf32>
    %c0_5 = arith.constant 0 : index
    %c0_6 = arith.constant 0 : index
    %6 = vector.load %arg3[%c0_5, %c0_6] : memref<16x16xf32, #tpu.memory_space<vmem>>, vector<16x16xf32>
    tpu.vector_store %arg3[%c0_5, %c0_6], %5 {strides = array<i32>} : memref<16x16xf32, #tpu.memory_space<vmem>>, vector<16x16xf32>,
    return
  }
}

</mosaic_0001>

<llo_original>
// kernel: public_classifier_forward.1
$region0: #{public_classifier_forward.1}
  #allocation0 [shape = 'u32[]', space=smem, size = 0x4, offset = 0x4, fixed_abs, tag = 'smem constant byte address 0x4 - core index']
  #allocation1 [shape = 'u32[72,128]{1,0:T(1,128)}', space=vmem, size = 0x9000, scoped, tag = 'internal scratch']
  %s0 = inlined_call_operand.vmem [shape: f32[16,32], index: 0, kind: input, shape index: {}]
  %s1 = inlined_call_operand.vmem [shape: f32[32,16], index: 1, kind: input, shape index: {}]
  %s2 = inlined_call_operand.vmem [shape: f32[1,16], index: 2, kind: input, shape index: {}]
  %s3 = inlined_call_operand.hbm [shape: f32[16,16], index: 3, kind: output, shape index: {}]
  %s4 = sld [smem:[#allocation0]]
  $region22: #{public_classifier_forward.1} parent=0
    _
  %s6 = ssub.s32 1, %s4
  %s7 = scalar_select 0, %s6, %s4
  $region1: #{public_classifier_forward.1} parent=0
    #allocation2 [shape = 'u8[8192]{0}', space=vmem, size = 0x2000, scoped, tag = 'output window, operand 0, single buffered']
    #allocation3 [shape = 's32[1]{0}', space=sflag, size = 0x4, scoped, tag = 'scoped memory for public_classifier_forward.1']
    %8 = vsyncpa [#allocation3], 0
    // Predicated region
    $region2: #{public_classifier_forward.1} parent=1 // pred_check
      _
    $region3: #{public_classifier_forward.1} parent=1 // pred_check_branch
      %10 = sbr.rel (0) target = $region5
    $region4: #{public_classifier_forward.1} parent=1 // pred_region
      _
    $region5: #{public_classifier_forward.1} parent=1 // pred_fallthru
      _
    // Predicated region
    $region6: #{public_classifier_forward.1} parent=1 // pred_check
      _
    $region7: #{public_classifier_forward.1} parent=1 // pred_check_branch
      %12 = sbr.rel (0) target = $region9
    $region8: #{public_classifier_forward.1} parent=1 // pred_region
      _
    $region9: #{public_classifier_forward.1} parent=1 // pred_fallthru
      _
    // Predicated region
    $region10: #{public_classifier_forward.1} parent=1 // pred_check
      _
    $region11: #{public_classifier_forward.1} parent=1 // pred_check_branch
      %14 = sbr.rel (0) target = $region13
    $region12: #{public_classifier_forward.1} parent=1 // pred_region
      _
    $region13: #{public_classifier_forward.1} parent=1 // pred_fallthru
      _
    %v15 = vld [vmem:[%s0] sm:$0xff]
    %v16 = vld [vmem:[%s0 + $0x8] sm:$0xff]
    %v17 = vld [vmem:[%s1] sm:$0xff]
    %v18 = vld [vmem:[%s1 + $0x8] sm:$0xff]
    %v19 = vld [vmem:[%s1 + $0x10] sm:$0xff]
    %v20 = vld [vmem:[%s1 + $0x18] sm:$0xff]
    %v21 = vld [vmem:[%s2] sm:$0x1]
    %v23 = vperm.slane %v21, 0
    %vm25 = vcmask 261120
    %v27 = vsel %vm25, %v15, 0
    %v30 = vsel %vm25, %v16, 0
    %32 = vmatpush.msra.mxu0 0.0
    %33 = vmatpush.msra.mxu0 0.0
    %34 = vmatpush.msra.mxu0 0.0
    %35 = vmatpush.msra.mxu0 0.0
    %36 = vmatpush.msra.mxu0 0.0
    %37 = vmatpush.msra.mxu0 0.0
    %38 = vmatpush.msra.mxu0 0.0
    %39 = vmatpush.msra.mxu0 0.0
    %40 = vmatpush.msra.mxu0 0.0
    %41 = vmatpush.msra.mxu0 0.0
    %42 = vmatpush.msra.mxu0 0.0
    %43 = vmatpush.msra.mxu0 0.0
    %44 = vmatpush.msra.mxu0 %v20
    %45 = vmatpush.msra.mxu0 %v19
    %46 = vmatpush.msra.mxu0 %v18
    %47 = vmatpush.msra.mxu0 %v17
    %48 = vmatmul.f32.gmra.mxu0 %v27
    %v49 = vpop.f32.mrf.mxu0
    %v50 = vadd.f32 %v23, %v49
    %51 = vmatmul.f32.gmra.mxu0 %v30
    %v52 = vpop.f32.mrf.mxu0
    %v53 = vadd.f32 %v23, %v52
    %54 = vdwg.mxu0
    %vm55 = vcmask 130048
    %56 = vst.msk [vmem:[#allocation2] sm:$0xff] %vm55, %v50
    %57 = vst.msk [vmem:[#allocation2 + $0x8] sm:$0xff] %vm55, %v53
    // Predicated region
    $region14: #{public_classifier_forward.1} parent=1 // pred_check
      _
    $region15: #{public_classifier_forward.1} parent=1 // pred_check_branch
      %59 = sbr.rel (0) target = $region17
    $region16: #{public_classifier_forward.1} parent=1 // pred_region
      %61 = vsyncadd [#allocation3], 0
      %s62 = sshll.u32 [#allocation2], 4
      %s63 = int_to_ptr.vmem [resolvable:$true] %s62
      %s64 = sshll.u32 %s3, 4
      %s65 = int_to_ptr.hbm [resolvable:$true] %s64
      %70 = dma.vmem_to_hbm [thread:$0]  %s63, 256, %s65, [#allocation3], 128, 128, 8
    $region17: #{public_classifier_forward.1} parent=1 // pred_fallthru
      _
    // Predicated region
    $region18: #{public_classifier_forward.1} parent=1 // pred_check
      _
    $region19: #{public_classifier_forward.1} parent=1 // pred_check_branch
      %72 = sbr.rel (0) target = $region21
    $region20: #{public_classifier_forward.1} parent=1 // pred_region
      %74 = dma.done [#allocation3], 256
    $region21: #{public_classifier_forward.1} parent=1 // pred_fallthru
      _
    %75 = vsyncpa [#allocation3], 1

</llo_original>
